<compile_context>
chip_gen: v5e
topology: v5e:2x2
jax: 0.10.0
libtpu: 0.0.40
codegen_flags: <defaults>
</compile_context>

<pallas_src>
import jax
import jax.numpy as jnp
from jax.experimental import pallas as pl
from jax.experimental.pallas import tpu as pltpu

# ----- module hyper-parameters (from the PyTorch script) -----
num_RU = 3
num_ref = 5
predicted_len = 3
UERU = 5
total_UE = UERU * num_RU                   # 15
HIDDEN = 64
D_IN = total_UE * num_RU                   # 45
D_OUT = total_UE * num_RU * predicted_len  # 135

# ----- padded (TPU-friendly) dims -----
HP = 128                                   # hidden padded to one lane group
GP = 4 * HP                                # packed gate width (512)
D_IN_P = 64                                # input feature dim padded 45 -> 64
D_OUT_P = 256                              # FC output padded to lane multiple


def lstm_fc_kernel(x_ref, wih_ref, whh_ref, b_ref, wfc_ref, bfc_ref,
                   y_ref, xg_scr):
    """Full LSTM over time + final Linear, entirely in VMEM.

    x_ref:   (T*Bp, D_IN_P)  f32   (time-major, batch padded to Bp)
    wih_ref: (D_IN_P, GP)    f32   (= W_ih^T, gate-blocks zero-padded to HP)
    whh_ref: (HP,   GP)      bf16  (= W_hh^T, padded)
    b_ref:   (1, GP)         f32   (= b_ih + b_hh, padded)
    wfc_ref: (HP, D_OUT_P)   bf16  (= W_fc^T, padded)
    bfc_ref: (1, D_OUT_P)    f32
    y_ref:   (Bp, D_OUT_P)   f32
    xg_scr:  (T*Bp, GP)      f32   VMEM scratch for the hoisted projection
    """
    T = num_ref
    Bp = y_ref.shape[0]

    # --- hoisted: all-timestep input projection + bias, one MXU pass (f32),
    # staged in VMEM scratch so it is never live in vregs across the loop.
    xg_scr[...] = jnp.dot(x_ref[...], wih_ref[...],
                          preferred_element_type=jnp.float32) + b_ref[...]

    h = jnp.zeros((Bp, HP), jnp.float32)
    c = jnp.zeros((Bp, HP), jnp.float32)

    # --- serial recurrence: small h @ W_hh dot + elementwise gates.
    # T is static -> this Python loop fully unrolls; only h/c stay in vregs.
    # W_hh and the per-step xg slice are fresh, short-lived VMEM reads.
    for t in range(T):
        gates = xg_scr[pl.ds(t * Bp, Bp), :] + jnp.dot(
            h.astype(whh_ref.dtype), whh_ref[...],
            preferred_element_type=jnp.float32)
        # 128-lane-aligned gate slices (i, f, g, o)
        i_g = jax.nn.sigmoid(gates[:, 0 * HP:1 * HP])
        f_g = jax.nn.sigmoid(gates[:, 1 * HP:2 * HP])
        g_g = jnp.tanh(gates[:, 2 * HP:3 * HP])
        o_g = jax.nn.sigmoid(gates[:, 3 * HP:4 * HP])
        c = f_g * c + i_g * g_g
        h = o_g * jnp.tanh(c)

    # --- final linear head on last hidden state (lane-dense 256-wide store) ---
    y_ref[...] = (jnp.dot(h.astype(wfc_ref.dtype), wfc_ref[...],
                          preferred_element_type=jnp.float32)
                  + bfc_ref[...])


def _pad_gate_cols(w_t, h, hp):
    """(rows, 4h) -> (rows, 4hp): zero-pad each of the 4 gate blocks to hp."""
    blocks = []
    for k in range(4):
        blk = w_t[:, k * h:(k + 1) * h]
        blocks.append(jnp.pad(blk, ((0, 0), (0, hp - h))))
    return jnp.concatenate(blocks, axis=1)


def prep_params(params):
    """Pad/transpose raw PyTorch-shaped params into the kernel layout.

    Call ONCE (outside the per-forward path); the result is reused across
    forward calls so the padding/transpose XLA ops never sit on the hot path.
    """
    w_ih, w_hh, b_ih, b_hh, w_fc, b_fc = params
    wih_t = _pad_gate_cols(w_ih.T, HIDDEN, HP)                   # (D_IN, GP)
    wih_t = jnp.pad(wih_t, ((0, D_IN_P - D_IN), (0, 0)))         # (D_IN_P, GP)
    whh_t = _pad_gate_cols(w_hh.T, HIDDEN, HP)                   # (H, GP)
    whh_t = jnp.pad(whh_t, ((0, HP - HIDDEN), (0, 0)))           # (HP, GP)
    b = _pad_gate_cols((b_ih + b_hh)[None, :], HIDDEN, HP)       # (1, GP)
    wfc_t = jnp.pad(w_fc.T, ((0, HP - HIDDEN), (0, D_OUT_P - D_OUT)))  # (HP,256)
    bfc = jnp.pad(b_fc[None, :], ((0, 0), (0, D_OUT_P - D_OUT)))       # (1, 256)
    return (wih_t.astype(jnp.float32),     # f32: one-shot projection operand
            whh_t.astype(jnp.bfloat16),    # bf16: serial-path MXU operand
            b.astype(jnp.float32),
            wfc_t.astype(jnp.bfloat16),    # bf16: FC MXU operand
            bfc.astype(jnp.float32))


def lstm_model_forward(x, prepped):
    """x: (B, num_ref, total_UE, num_RU) float32, prepped = prep_params(...).
    Returns (B, predicted_len, total_UE, num_RU)."""
    B = x.shape[0]
    Bp = max(8, ((B + 7) // 8) * 8)                 # sublane-aligned batch

    # view(batch, num_ref, -1), move time first, pad batch + features,
    # flatten to (T*Bp, D_IN_P), keep f32 for the hoisted projection.
    x_seq = x.reshape(B, num_ref, D_IN).transpose(1, 0, 2)        # (T, B, D_in)
    x_pad = jnp.zeros((num_ref, Bp, D_IN_P), jnp.float32)
    x_pad = x_pad.at[:, :B, :D_IN].set(x_seq)
    x2d = x_pad.reshape(num_ref * Bp, D_IN_P)                     # (T*Bp, 64)

    wih_p, whh_p, b_p, wfc_p, bfc_p = prepped

    y_pad = pl.pallas_call(
        lstm_fc_kernel,
        out_shape=jax.ShapeDtypeStruct((Bp, D_OUT_P), jnp.float32),
        in_specs=[pl.BlockSpec(memory_space=pltpu.MemorySpace.VMEM)] * 6,
        out_specs=pl.BlockSpec(memory_space=pltpu.MemorySpace.VMEM),
        scratch_shapes=[pltpu.VMEM((num_ref * Bp, GP), jnp.float32)],
    )(x2d, wih_p, whh_p, b_p, wfc_p, bfc_p)

    y = y_pad[:B, :D_OUT]
    return y.reshape(B, predicted_len, total_UE, num_RU)


def reference_forward(x, params):
    """Pure-JAX f32 reference of the PyTorch forward (sanity check)."""
    w_ih, w_hh, b_ih, b_hh, w_fc, b_fc = params
    B = x.shape[0]
    x_seq = x.reshape(B, num_ref, D_IN)
    H = HIDDEN
    h = jnp.zeros((B, H), jnp.float32)
    c = jnp.zeros((B, H), jnp.float32)
    for t in range(num_ref):
        gates = x_seq[:, t, :] @ w_ih.T + h @ w_hh.T + b_ih + b_hh
        i_g = jax.nn.sigmoid(gates[:, 0 * H:1 * H])
        f_g = jax.nn.sigmoid(gates[:, 1 * H:2 * H])
        g_g = jnp.tanh(gates[:, 2 * H:3 * H])
        o_g = jax.nn.sigmoid(gates[:, 3 * H:4 * H])
        c = f_g * c + i_g * g_g
        h = o_g * jnp.tanh(c)
    y = h @ w_fc.T + b_fc
    return y.reshape(B, predicted_len, total_UE, num_RU)


def init_params(key):
    """Deterministic init matching PyTorch parameter shapes (raw layout)."""
    k1, k2, k3, k4, k5, k6 = jax.random.split(key, 6)
    bound = 1.0 / jnp.sqrt(HIDDEN)
    w_ih = jax.random.uniform(k1, (4 * HIDDEN, D_IN), jnp.float32, -bound, bound)
    w_hh = jax.random.uniform(k2, (4 * HIDDEN, HIDDEN), jnp.float32, -bound, bound)
    b_ih = jax.random.uniform(k3, (4 * HIDDEN,), jnp.float32, -bound, bound)
    b_hh = jax.random.uniform(k4, (4 * HIDDEN,), jnp.float32, -bound, bound)
    w_fc = jax.random.uniform(k5, (D_OUT, HIDDEN), jnp.float32, -bound, bound)
    b_fc = jax.random.uniform(k6, (D_OUT,), jnp.float32, -bound, bound)
    return (w_ih, w_hh, b_ih, b_hh, w_fc, b_fc)


if __name__ == "__main__":
    key = jax.random.PRNGKey(0)
    kx, kp = jax.random.split(key)

    batch = 2
    # Input consistent with x.view(batch, num_ref, -1): (B, num_ref, total_UE, num_RU)
    x = jax.random.normal(kx, (batch, num_ref, total_UE, num_RU), jnp.float32)
    params = init_params(kp)

    # One-time weight prep (hoisted out of the per-call path), jitted forward.
    prepped = jax.tree_util.tree_map(jax.block_until_ready, prep_params(params))
    forward = jax.jit(lstm_model_forward)

    y = forward(x, prepped)
    y = jax.block_until_ready(y)

    y_ref = reference_forward(x, params)
    assert y.shape == (batch, predicted_len, total_UE, num_RU)
    # bf16 recurrent/FC matmul operands (f32 accumulate) vs f32 reference.
    assert jnp.allclose(y, y_ref, atol=2e-2, rtol=2e-2), (
        float(jnp.max(jnp.abs(y - y_ref))))

    print("KERNEL_OK")
</pallas_src>

<mosaic_0001>
module attributes {stable_mosaic.version = 11 : i64} {
  func.func @lstm_fc_kernel(%arg0: memref<40x64xf32, #tpu.memory_space<vmem>>, %arg1: memref<64x512xf32, #tpu.memory_space<vmem>>, %arg2: memref<128x512xbf16, #tpu.memory_space<vmem>>, %arg3: memref<1x512xf32, #tpu.memory_space<vmem>>, %arg4: memref<128x256xbf16, #tpu.memory_space<vmem>>, %arg5: memref<1x256xf32, #tpu.memory_space<vmem>>, %arg6: memref<8x256xf32, #tpu.memory_space<vmem>>, %arg7: memref<40x512xf32, #tpu.memory_space<vmem>>) attributes {dimension_semantics = [], scalar_prefetch = 0 : i64, scratch_operands = 1 : i64, tpu.core_type = #tpu.core_type<tc>} {
    %c0 = arith.constant 0 : index
    %c0_0 = arith.constant 0 : index
    %0 = vector.load %arg0[%c0, %c0_0] : memref<40x64xf32, #tpu.memory_space<vmem>>, vector<40x64xf32>
    %c0_1 = arith.constant 0 : index
    %c0_2 = arith.constant 0 : index
    %1 = vector.load %arg1[%c0_1, %c0_2] : memref<64x512xf32, #tpu.memory_space<vmem>>, vector<64x512xf32>
    %cst = arith.constant dense<0.000000e+00> : vector<40x512xf32>
    %2 = tpu.matmul %0, %1, %cst {dimension_numbers = #tpu.dot_dimension_numbers<[1], [0], [0], [1], [0, 0, 1, 1], [], []>} : vector<40x64xf32>, vector<64x512xf32>, vector<40x512xf32> -> vector<40x512xf32>
    %c0_3 = arith.constant 0 : index
    %c0_4 = arith.constant 0 : index
    %3 = vector.load %arg3[%c0_3, %c0_4] : memref<1x512xf32, #tpu.memory_space<vmem>>, vector<1x512xf32>
    %4 = vector.broadcast %3 : vector<1x512xf32> to vector<40x512xf32>
    %5 = arith.addf %2, %4 : vector<40x512xf32>
    %c0_5 = arith.constant 0 : index
    %c0_6 = arith.constant 0 : index
    %6 = vector.load %arg7[%c0_5, %c0_6] : memref<40x512xf32, #tpu.memory_space<vmem>>, vector<40x512xf32>
    tpu.vector_store %arg7[%c0_5, %c0_6], %5 {strides = array<i32>} : memref<40x512xf32, #tpu.memory_space<vmem>>, vector<40x512xf32>,
    %cst_7 = arith.constant 0.000000e+00 : f32
    %7 = vector.broadcast %cst_7 : f32 to vector<8x128xf32>
    %cst_8 = arith.constant 0.000000e+00 : f32
    %8 = vector.broadcast %cst_8 : f32 to vector<8x128xf32>
    %c0_9 = arith.constant 0 : index
    %c0_10 = arith.constant 0 : index
    %9 = vector.load %arg7[%c0_9, %c0_10] : memref<40x512xf32, #tpu.memory_space<vmem>>, vector<8x512xf32>
    %10 = arith.truncf %7 : vector<8x128xf32> to vector<8x128xbf16>
    %c0_11 = arith.constant 0 : index
    %c0_12 = arith.constant 0 : index
    %11 = vector.load %arg2[%c0_11, %c0_12] : memref<128x512xbf16, #tpu.memory_space<vmem>>, vector<128x512xbf16>
    %cst_13 = arith.constant dense<0.000000e+00> : vector<8x512xf32>
    %12 = tpu.matmul %10, %11, %cst_13 {dimension_numbers = #tpu.dot_dimension_numbers<[1], [0], [0], [1], [0, 0, 1, 1], [], []>} : vector<8x128xbf16>, vector<128x512xbf16>, vector<8x512xf32> -> vector<8x512xf32>
    %13 = arith.addf %9, %12 : vector<8x512xf32>
    %14 = vector.extract_strided_slice %13 {offsets = [0, 0], sizes = [8, 128], strides = [1, 1]} : vector<8x512xf32> to vector<8x128xf32>
    %15 = arith.negf %14 : vector<8x128xf32>
    %16 = math.exp %15 : vector<8x128xf32>
    %cst_14 = arith.constant 1.000000e+00 : f32
    %17 = vector.broadcast %cst_14 : f32 to vector<8x128xf32>
    %18 = arith.addf %17, %16 : vector<8x128xf32>
    %19 = arith.divf %17, %18 : vector<8x128xf32>
    %20 = vector.extract_strided_slice %13 {offsets = [0, 128], sizes = [8, 128], strides = [1, 1]} : vector<8x512xf32> to vector<8x128xf32>
    %21 = arith.negf %20 : vector<8x128xf32>
    %22 = math.exp %21 : vector<8x128xf32>
    %cst_15 = arith.constant 1.000000e+00 : f32
    %23 = vector.broadcast %cst_15 : f32 to vector<8x128xf32>
    %24 = arith.addf %23, %22 : vector<8x128xf32>
    %25 = arith.divf %23, %24 : vector<8x128xf32>
    %26 = vector.extract_strided_slice %13 {offsets = [0, 256], sizes = [8, 128], strides = [1, 1]} : vector<8x512xf32> to vector<8x128xf32>
    %27 = math.tanh %26 : vector<8x128xf32>
    %28 = vector.extract_strided_slice %13 {offsets = [0, 384], sizes = [8, 128], strides = [1, 1]} : vector<8x512xf32> to vector<8x128xf32>
    %29 = arith.negf %28 : vector<8x128xf32>
    %30 = math.exp %29 : vector<8x128xf32>
    %cst_16 = arith.constant 1.000000e+00 : f32
    %31 = vector.broadcast %cst_16 : f32 to vector<8x128xf32>
    %32 = arith.addf %31, %30 : vector<8x128xf32>
    %33 = arith.divf %31, %32 : vector<8x128xf32>
    %34 = arith.mulf %25, %8 : vector<8x128xf32>
    %35 = arith.mulf %19, %27 : vector<8x128xf32>
    %36 = arith.addf %34, %35 : vector<8x128xf32>
    %37 = math.tanh %36 : vector<8x128xf32>
    %38 = arith.mulf %33, %37 : vector<8x128xf32>
    %c8 = arith.constant 8 : index
    %c0_17 = arith.constant 0 : index
    %39 = vector.load %arg7[%c8, %c0_17] : memref<40x512xf32, #tpu.memory_space<vmem>>, vector<8x512xf32>
    %40 = arith.truncf %38 : vector<8x128xf32> to vector<8x128xbf16>
    %c0_18 = arith.constant 0 : index
    %c0_19 = arith.constant 0 : index
    %41 = vector.load %arg2[%c0_18, %c0_19] : memref<128x512xbf16, #tpu.memory_space<vmem>>, vector<128x512xbf16>
    %cst_20 = arith.constant dense<0.000000e+00> : vector<8x512xf32>
    %42 = tpu.matmul %40, %41, %cst_20 {dimension_numbers = #tpu.dot_dimension_numbers<[1], [0], [0], [1], [0, 0, 1, 1], [], []>} : vector<8x128xbf16>, vector<128x512xbf16>, vector<8x512xf32> -> vector<8x512xf32>
    %43 = arith.addf %39, %42 : vector<8x512xf32>
    %44 = vector.extract_strided_slice %43 {offsets = [0, 0], sizes = [8, 128], strides = [1, 1]} : vector<8x512xf32> to vector<8x128xf32>
    %45 = arith.negf %44 : vector<8x128xf32>
    %46 = math.exp %45 : vector<8x128xf32>
    %cst_21 = arith.constant 1.000000e+00 : f32
    %47 = vector.broadcast %cst_21 : f32 to vector<8x128xf32>
    %48 = arith.addf %47, %46 : vector<8x128xf32>
    %49 = arith.divf %47, %48 : vector<8x128xf32>
    %50 = vector.extract_strided_slice %43 {offsets = [0, 128], sizes = [8, 128], strides = [1, 1]} : vector<8x512xf32> to vector<8x128xf32>
    %51 = arith.negf %50 : vector<8x128xf32>
    %52 = math.exp %51 : vector<8x128xf32>
    %cst_22 = arith.constant 1.000000e+00 : f32
    %53 = vector.broadcast %cst_22 : f32 to vector<8x128xf32>
    %54 = arith.addf %53, %52 : vector<8x128xf32>
    %55 = arith.divf %53, %54 : vector<8x128xf32>
    %56 = vector.extract_strided_slice %43 {offsets = [0, 256], sizes = [8, 128], strides = [1, 1]} : vector<8x512xf32> to vector<8x128xf32>
    %57 = math.tanh %56 : vector<8x128xf32>
    %58 = vector.extract_strided_slice %43 {offsets = [0, 384], sizes = [8, 128], strides = [1, 1]} : vector<8x512xf32> to vector<8x128xf32>
    %59 = arith.negf %58 : vector<8x128xf32>
    %60 = math.exp %59 : vector<8x128xf32>
    %cst_23 = arith.constant 1.000000e+00 : f32
    %61 = vector.broadcast %cst_23 : f32 to vector<8x128xf32>
    %62 = arith.addf %61, %60 : vector<8x128xf32>
    %63 = arith.divf %61, %62 : vector<8x128xf32>
    %64 = arith.mulf %55, %36 : vector<8x128xf32>
    %65 = arith.mulf %49, %57 : vector<8x128xf32>
    %66 = arith.addf %64, %65 : vector<8x128xf32>
    %67 = math.tanh %66 : vector<8x128xf32>
    %68 = arith.mulf %63, %67 : vector<8x128xf32>
    %c16 = arith.constant 16 : index
    %c0_24 = arith.constant 0 : index
    %69 = vector.load %arg7[%c16, %c0_24] : memref<40x512xf32, #tpu.memory_space<vmem>>, vector<8x512xf32>
    %70 = arith.truncf %68 : vector<8x128xf32> to vector<8x128xbf16>
    %c0_25 = arith.constant 0 : index
    %c0_26 = arith.constant 0 : index
    %71 = vector.load %arg2[%c0_25, %c0_26] : memref<128x512xbf16, #tpu.memory_space<vmem>>, vector<128x512xbf16>
    %cst_27 = arith.constant dense<0.000000e+00> : vector<8x512xf32>
    %72 = tpu.matmul %70, %71, %cst_27 {dimension_numbers = #tpu.dot_dimension_numbers<[1], [0], [0], [1], [0, 0, 1, 1], [], []>} : vector<8x128xbf16>, vector<128x512xbf16>, vector<8x512xf32> -> vector<8x512xf32>
    %73 = arith.addf %69, %72 : vector<8x512xf32>
    %74 = vector.extract_strided_slice %73 {offsets = [0, 0], sizes = [8, 128], strides = [1, 1]} : vector<8x512xf32> to vector<8x128xf32>
    %75 = arith.negf %74 : vector<8x128xf32>
    %76 = math.exp %75 : vector<8x128xf32>
    %cst_28 = arith.constant 1.000000e+00 : f32
    %77 = vector.broadcast %cst_28 : f32 to vector<8x128xf32>
    %78 = arith.addf %77, %76 : vector<8x128xf32>
    %79 = arith.divf %77, %78 : vector<8x128xf32>
    %80 = vector.extract_strided_slice %73 {offsets = [0, 128], sizes = [8, 128], strides = [1, 1]} : vector<8x512xf32> to vector<8x128xf32>
    %81 = arith.negf %80 : vector<8x128xf32>
    %82 = math.exp %81 : vector<8x128xf32>
    %cst_29 = arith.constant 1.000000e+00 : f32
    %83 = vector.broadcast %cst_29 : f32 to vector<8x128xf32>
    %84 = arith.addf %83, %82 : vector<8x128xf32>
    %85 = arith.divf %83, %84 : vector<8x128xf32>
    %86 = vector.extract_strided_slice %73 {offsets = [0, 256], sizes = [8, 128], strides = [1, 1]} : vector<8x512xf32> to vector<8x128xf32>
    %87 = math.tanh %86 : vector<8x128xf32>
    %88 = vector.extract_strided_slice %73 {offsets = [0, 384], sizes = [8, 128], strides = [1, 1]} : vector<8x512xf32> to vector<8x128xf32>
    %89 = arith.negf %88 : vector<8x128xf32>
    %90 = math.exp %89 : vector<8x128xf32>
    %cst_30 = arith.constant 1.000000e+00 : f32
    %91 = vector.broadcast %cst_30 : f32 to vector<8x128xf32>
    %92 = arith.addf %91, %90 : vector<8x128xf32>
    %93 = arith.divf %91, %92 : vector<8x128xf32>
    %94 = arith.mulf %85, %66 : vector<8x128xf32>
    %95 = arith.mulf %79, %87 : vector<8x128xf32>
    %96 = arith.addf %94, %95 : vector<8x128xf32>
    %97 = math.tanh %96 : vector<8x128xf32>
    %98 = arith.mulf %93, %97 : vector<8x128xf32>
    %c24 = arith.constant 24 : index
    %c0_31 = arith.constant 0 : index
    %99 = vector.load %arg7[%c24, %c0_31] : memref<40x512xf32, #tpu.memory_space<vmem>>, vector<8x512xf32>
    %100 = arith.truncf %98 : vector<8x128xf32> to vector<8x128xbf16>
    %c0_32 = arith.constant 0 : index
    %c0_33 = arith.constant 0 : index
    %101 = vector.load %arg2[%c0_32, %c0_33] : memref<128x512xbf16, #tpu.memory_space<vmem>>, vector<128x512xbf16>
    %cst_34 = arith.constant dense<0.000000e+00> : vector<8x512xf32>
    %102 = tpu.matmul %100, %101, %cst_34 {dimension_numbers = #tpu.dot_dimension_numbers<[1], [0], [0], [1], [0, 0, 1, 1], [], []>} : vector<8x128xbf16>, vector<128x512xbf16>, vector<8x512xf32> -> vector<8x512xf32>
    %103 = arith.addf %99, %102 : vector<8x512xf32>
    %104 = vector.extract_strided_slice %103 {offsets = [0, 0], sizes = [8, 128], strides = [1, 1]} : vector<8x512xf32> to vector<8x128xf32>
    %105 = arith.negf %104 : vector<8x128xf32>
    %106 = math.exp %105 : vector<8x128xf32>
    %cst_35 = arith.constant 1.000000e+00 : f32
    %107 = vector.broadcast %cst_35 : f32 to vector<8x128xf32>
    %108 = arith.addf %107, %106 : vector<8x128xf32>
    %109 = arith.divf %107, %108 : vector<8x128xf32>
    %110 = vector.extract_strided_slice %103 {offsets = [0, 128], sizes = [8, 128], strides = [1, 1]} : vector<8x512xf32> to vector<8x128xf32>
    %111 = arith.negf %110 : vector<8x128xf32>
    %112 = math.exp %111 : vector<8x128xf32>
    %cst_36 = arith.constant 1.000000e+00 : f32
    %113 = vector.broadcast %cst_36 : f32 to vector<8x128xf32>
    %114 = arith.addf %113, %112 : vector<8x128xf32>
    %115 = arith.divf %113, %114 : vector<8x128xf32>
    %116 = vector.extract_strided_slice %103 {offsets = [0, 256], sizes = [8, 128], strides = [1, 1]} : vector<8x512xf32> to vector<8x128xf32>
    %117 = math.tanh %116 : vector<8x128xf32>
    %118 = vector.extract_strided_slice %103 {offsets = [0, 384], sizes = [8, 128], strides = [1, 1]} : vector<8x512xf32> to vector<8x128xf32>
    %119 = arith.negf %118 : vector<8x128xf32>
    %120 = math.exp %119 : vector<8x128xf32>
    %cst_37 = arith.constant 1.000000e+00 : f32
    %121 = vector.broadcast %cst_37 : f32 to vector<8x128xf32>
    %122 = arith.addf %121, %120 : vector<8x128xf32>
    %123 = arith.divf %121, %122 : vector<8x128xf32>
    %124 = arith.mulf %115, %96 : vector<8x128xf32>
    %125 = arith.mulf %109, %117 : vector<8x128xf32>
    %126 = arith.addf %124, %125 : vector<8x128xf32>
    %127 = math.tanh %126 : vector<8x128xf32>
    %128 = arith.mulf %123, %127 : vector<8x128xf32>
    %c32 = arith.constant 32 : index
    %c0_38 = arith.constant 0 : index
    %129 = vector.load %arg7[%c32, %c0_38] : memref<40x512xf32, #tpu.memory_space<vmem>>, vector<8x512xf32>
    %130 = arith.truncf %128 : vector<8x128xf32> to vector<8x128xbf16>
    %c0_39 = arith.constant 0 : index
    %c0_40 = arith.constant 0 : index
    %131 = vector.load %arg2[%c0_39, %c0_40] : memref<128x512xbf16, #tpu.memory_space<vmem>>, vector<128x512xbf16>
    %cst_41 = arith.constant dense<0.000000e+00> : vector<8x512xf32>
    %132 = tpu.matmul %130, %131, %cst_41 {dimension_numbers = #tpu.dot_dimension_numbers<[1], [0], [0], [1], [0, 0, 1, 1], [], []>} : vector<8x128xbf16>, vector<128x512xbf16>, vector<8x512xf32> -> vector<8x512xf32>
    %133 = arith.addf %129, %132 : vector<8x512xf32>
    %134 = vector.extract_strided_slice %133 {offsets = [0, 0], sizes = [8, 128], strides = [1, 1]} : vector<8x512xf32> to vector<8x128xf32>
    %135 = arith.negf %134 : vector<8x128xf32>
    %136 = math.exp %135 : vector<8x128xf32>
    %cst_42 = arith.constant 1.000000e+00 : f32
    %137 = vector.broadcast %cst_42 : f32 to vector<8x128xf32>
    %138 = arith.addf %137, %136 : vector<8x128xf32>
    %139 = arith.divf %137, %138 : vector<8x128xf32>
    %140 = vector.extract_strided_slice %133 {offsets = [0, 128], sizes = [8, 128], strides = [1, 1]} : vector<8x512xf32> to vector<8x128xf32>
    %141 = arith.negf %140 : vector<8x128xf32>
    %142 = math.exp %141 : vector<8x128xf32>
    %cst_43 = arith.constant 1.000000e+00 : f32
    %143 = vector.broadcast %cst_43 : f32 to vector<8x128xf32>
    %144 = arith.addf %143, %142 : vector<8x128xf32>
    %145 = arith.divf %143, %144 : vector<8x128xf32>
    %146 = vector.extract_strided_slice %133 {offsets = [0, 256], sizes = [8, 128], strides = [1, 1]} : vector<8x512xf32> to vector<8x128xf32>
    %147 = math.tanh %146 : vector<8x128xf32>
    %148 = vector.extract_strided_slice %133 {offsets = [0, 384], sizes = [8, 128], strides = [1, 1]} : vector<8x512xf32> to vector<8x128xf32>
    %149 = arith.negf %148 : vector<8x128xf32>
    %150 = math.exp %149 : vector<8x128xf32>
    %cst_44 = arith.constant 1.000000e+00 : f32
    %151 = vector.broadcast %cst_44 : f32 to vector<8x128xf32>
    %152 = arith.addf %151, %150 : vector<8x128xf32>
    %153 = arith.divf %151, %152 : vector<8x128xf32>
    %154 = arith.mulf %145, %126 : vector<8x128xf32>
    %155 = arith.mulf %139, %147 : vector<8x128xf32>
    %156 = arith.addf %154, %155 : vector<8x128xf32>
    %157 = math.tanh %156 : vector<8x128xf32>
    %158 = arith.mulf %153, %157 : vector<8x128xf32>
    %159 = arith.truncf %158 : vector<8x128xf32> to vector<8x128xbf16>
    %c0_45 = arith.constant 0 : index
    %c0_46 = arith.constant 0 : index
    %160 = vector.load %arg4[%c0_45, %c0_46] : memref<128x256xbf16, #tpu.memory_space<vmem>>, vector<128x256xbf16>
    %cst_47 = arith.constant dense<0.000000e+00> : vector<8x256xf32>
    %161 = tpu.matmul %159, %160, %cst_47 {dimension_numbers = #tpu.dot_dimension_numbers<[1], [0], [0], [1], [0, 0, 1, 1], [], []>} : vector<8x128xbf16>, vector<128x256xbf16>, vector<8x256xf32> -> vector<8x256xf32>
    %c0_48 = arith.constant 0 : index
    %c0_49 = arith.constant 0 : index
    %162 = vector.load %arg5[%c0_48, %c0_49] : memref<1x256xf32, #tpu.memory_space<vmem>>, vector<1x256xf32>
    %163 = vector.broadcast %162 : vector<1x256xf32> to vector<8x256xf32>
    %164 = arith.addf %161, %163 : vector<8x256xf32>
    %c0_50 = arith.constant 0 : index
    %c0_51 = arith.constant 0 : index
    %165 = vector.load %arg6[%c0_50, %c0_51] : memref<8x256xf32, #tpu.memory_space<vmem>>, vector<8x256xf32>
    tpu.vector_store %arg6[%c0_50, %c0_51], %164 {strides = array<i32>} : memref<8x256xf32, #tpu.memory_space<vmem>>, vector<8x256xf32>,
    return
  }
}

</mosaic_0001>

<llo_original>
// kernel: lstm_model_forward.1
$region0: #{lstm_model_forward.1}
  #allocation0 [shape = 'u32[]', space=smem, size = 0x4, offset = 0x4, fixed_abs, tag = 'smem constant byte address 0x4 - core index']
  #allocation1 [shape = 'u32[72,128]{1,0:T(1,128)}', space=vmem, size = 0x9000, scoped, tag = 'internal scratch']
  #allocation2 [shape = 'f32[40,512]{1,0:T(8,128)}', space=vmem, size = 0x14000, scoped, tag = 'scratch operand']
  %s0 = inlined_call_operand.vmem [shape: f32[40,64], index: 0, kind: input, shape index: {}]
  %s1 = inlined_call_operand.vmem [shape: f32[64,512], index: 1, kind: input, shape index: {}]
  %s2 = inlined_call_operand.hbm [shape: bf16[128,512], index: 2, kind: input, shape index: {}]
  %s3 = inlined_call_operand.vmem [shape: f32[1,512], index: 3, kind: input, shape index: {}]
  %s4 = inlined_call_operand.vmem [shape: bf16[128,256], index: 4, kind: input, shape index: {}]
  %s5 = inlined_call_operand.vmem [shape: f32[1,256], index: 5, kind: input, shape index: {}]
  %s6 = inlined_call_operand.vmem [shape: f32[8,256], index: 6, kind: output, shape index: {}]
  %s7 = sld [smem:[#allocation0]]
  $region38: #{lstm_model_forward.1} parent=0
    _
  %s9 = ssub.s32 1, %s7
  %s10 = scalar_select 0, %s9, %s7
  $region1: #{lstm_model_forward.1} parent=0
    #allocation3 [shape = 'u8[131072]{0}', space=vmem, size = 0x20000, scoped, tag = 'input window, operand 2, single buffered']
    #allocation4 [shape = 's32[1]{0}', space=sflag, size = 0x4, scoped, tag = 'scoped memory for lstm_model_forward.1']
    %11 = vsyncpa [#allocation4], 0
    // Predicated region
    $region2: #{lstm_model_forward.1} parent=1 // pred_check
      _
    $region3: #{lstm_model_forward.1} parent=1 // pred_check_branch
      %13 = sbr.rel (0) target = $region5
    $region4: #{lstm_model_forward.1} parent=1 // pred_region
      _
    $region5: #{lstm_model_forward.1} parent=1 // pred_fallthru
      _
    // Predicated region
    $region6: #{lstm_model_forward.1} parent=1 // pred_check
      _
    $region7: #{lstm_model_forward.1} parent=1 // pred_check_branch
      %15 = sbr.rel (0) target = $region9
    $region8: #{lstm_model_forward.1} parent=1 // pred_region
      _
    $region9: #{lstm_model_forward.1} parent=1 // pred_fallthru
      _
    // Predicated region
    $region10: #{lstm_model_forward.1} parent=1 // pred_check
      _
    $region11: #{lstm_model_forward.1} parent=1 // pred_check_branch
      %17 = sbr.rel (0) target = $region13
    $region12: #{lstm_model_forward.1} parent=1 // pred_region
      %19 = vsyncadd [#allocation4], 0
      %s20 = sshll.u32 %s2, 4
      %s21 = int_to_ptr.hbm [resolvable:$true] %s20
      %s22 = sshll.u32 [#allocation3], 4
      %s23 = int_to_ptr.vmem [resolvable:$true] %s22
      %28 = dma.hbm_to_vmem [thread:$0]  %s21, 4096, %s23, [#allocation4], 256, 256, 16
    $region13: #{lstm_model_forward.1} parent=1 // pred_fallthru
      _
    // Predicated region
    $region14: #{lstm_model_forward.1} parent=1 // pred_check
      _
    $region15: #{lstm_model_forward.1} parent=1 // pred_check_branch
      %30 = sbr.rel (0) target = $region17
    $region16: #{lstm_model_forward.1} parent=1 // pred_region
      _
    $region17: #{lstm_model_forward.1} parent=1 // pred_fallthru
      _
    // Predicated region
    $region18: #{lstm_model_forward.1} parent=1 // pred_check
      _
    $region19: #{lstm_model_forward.1} parent=1 // pred_check_branch
      %32 = sbr.rel (0) target = $region21
    $region20: #{lstm_model_forward.1} parent=1 // pred_region
      _
    $region21: #{lstm_model_forward.1} parent=1 // pred_fallthru
      _
    // Predicated region
    $region22: #{lstm_model_forward.1} parent=1 // pred_check
      _
    $region23: #{lstm_model_forward.1} parent=1 // pred_check_branch
      %34 = sbr.rel (0) target = $region25
    $region24: #{lstm_model_forward.1} parent=1 // pred_region
      _
    $region25: #{lstm_model_forward.1} parent=1 // pred_fallthru
      _
    // Predicated region
    $region26: #{lstm_model_forward.1} parent=1 // pred_check
      _
    $region27: #{lstm_model_forward.1} parent=1 // pred_check_branch
      %36 = sbr.rel (0) target = $region29
    $region28: #{lstm_model_forward.1} parent=1 // pred_region
      %38 = dma.done [#allocation4], 4096
    $region29: #{lstm_model_forward.1} parent=1 // pred_fallthru
      _
    %v40 = vld [vmem:[%s0] sm:$0xff]
    %v41 = vld [vmem:[%s0 + $0x8] sm:$0xff]
    %v42 = vld [vmem:[%s0 + $0x10] sm:$0xff]
    %v43 = vld [vmem:[%s0 + $0x18] sm:$0xff]
    %v44 = vld [vmem:[%s0 + $0x20] sm:$0xff]
    %v45 = vld [vmem:[%s1] sm:$0xff]
    %v46 = vld [vmem:[%s1 + $0x8] sm:$0xff]
    %v47 = vld [vmem:[%s1 + $0x10] sm:$0xff]
    %v48 = vld [vmem:[%s1 + $0x18] sm:$0xff]
    %v49 = vld [vmem:[%s1 + $0x20] sm:$0xff]
    %v50 = vld [vmem:[%s1 + $0x28] sm:$0xff]
    %v51 = vld [vmem:[%s1 + $0x30] sm:$0xff]
    %v52 = vld [vmem:[%s1 + $0x38] sm:$0xff]
    %v53 = vld [vmem:[%s1 + $0x40] sm:$0xff]
    %v54 = vld [vmem:[%s1 + $0x48] sm:$0xff]
    %v55 = vld [vmem:[%s1 + $0x50] sm:$0xff]
    %v56 = vld [vmem:[%s1 + $0x58] sm:$0xff]
    %v57 = vld [vmem:[%s1 + $0x60] sm:$0xff]
    %v58 = vld [vmem:[%s1 + $0x68] sm:$0xff]
    %v59 = vld [vmem:[%s1 + $0x70] sm:$0xff]
    %v60 = vld [vmem:[%s1 + $0x78] sm:$0xff]
    %v61 = vld [vmem:[%s1 + $0x80] sm:$0xff]
    %v62 = vld [vmem:[%s1 + $0x88] sm:$0xff]
    %v63 = vld [vmem:[%s1 + $0x90] sm:$0xff]
    %v64 = vld [vmem:[%s1 + $0x98] sm:$0xff]
    %v65 = vld [vmem:[%s1 + $0xa0] sm:$0xff]
    %v66 = vld [vmem:[%s1 + $0xa8] sm:$0xff]
    %v67 = vld [vmem:[%s1 + $0xb0] sm:$0xff]
    %v68 = vld [vmem:[%s1 + $0xb8] sm:$0xff]
    %v69 = vld [vmem:[%s1 + $0xc0] sm:$0xff]
    %v70 = vld [vmem:[%s1 + $0xc8] sm:$0xff]
    %v71 = vld [vmem:[%s1 + $0xd0] sm:$0xff]
    %v72 = vld [vmem:[%s1 + $0xd8] sm:$0xff]
    %v73 = vld [vmem:[%s1 + $0xe0] sm:$0xff]
    %v74 = vld [vmem:[%s1 + $0xe8] sm:$0xff]
    %v75 = vld [vmem:[%s1 + $0xf0] sm:$0xff]
    %v76 = vld [vmem:[%s1 + $0xf8] sm:$0xff]
    %v77 = vld [vmem:[%s3] sm:$0xf]
    %v79 = vperm.slane %v77, 0
    %v80 = vperm.slane %v77, 1
    %v81 = vperm.slane %v77, 2
    %v82 = vperm.slane %v77, 3
    %vm87 = vcmask 523264
    %v89 = vsel %vm87, %v40, 0
    %v92 = vsel %vm87, %v41, 0
    %v95 = vsel %vm87, %v42, 0
    %v98 = vsel %vm87, %v43, 0
    %v101 = vsel %vm87, %v44, 0
    %103 = vmatpush.msra.mxu0 0.0
    %104 = vmatpush.msra.mxu0 0.0
    %105 = vmatpush.msra.mxu0 0.0
    %106 = vmatpush.msra.mxu0 0.0
    %107 = vmatpush.msra.mxu0 0.0
    %108 = vmatpush.msra.mxu0 0.0
    %109 = vmatpush.msra.mxu0 0.0
    %110 = vmatpush.msra.mxu0 0.0
    %111 = vmatpush.msra.mxu0 %v73
    %112 = vmatpush.msra.mxu0 %v69
    %113 = vmatpush.msra.mxu0 %v65
    %114 = vmatpush.msra.mxu0 %v61
    %115 = vmatpush.msra.mxu0 %v57
    %116 = vmatpush.msra.mxu0 %v53
    %117 = vmatpush.msra.mxu0 %v49
    %118 = vmatpush.msra.mxu0 %v45
    %119 = vmatmul.f32.gmra.mxu0 %v89
    %v120 = vpop.f32.mrf.mxu0
    %v121 = vadd.f32 %v79, %v120
    %122 = vmatmul.f32.gmra.mxu0 %v92
    %v123 = vpop.f32.mrf.mxu0
    %v124 = vadd.f32 %v79, %v123
    %125 = vmatmul.f32.gmra.mxu0 %v95
    %v126 = vpop.f32.mrf.mxu0
    %v127 = vadd.f32 %v79, %v126
    %128 = vmatmul.f32.gmra.mxu0 %v98
    %v129 = vpop.f32.mrf.mxu0
    %v130 = vadd.f32 %v79, %v129
    %131 = vmatmul.f32.gmra.mxu0 %v101
    %v132 = vpop.f32.mrf.mxu0
    %v133 = vadd.f32 %v79, %v132
    %134 = vdwg.mxu0
    %135 = vmatpush.msra.mxu0 0.0
    %136 = vmatpush.msra.mxu0 0.0
    %137 = vmatpush.msra.mxu0 0.0
    %138 = vmatpush.msra.mxu0 0.0
    %139 = vmatpush.msra.mxu0 0.0
    %140 = vmatpush.msra.mxu0 0.0
    %141 = vmatpush.msra.mxu0 0.0
    %142 = vmatpush.msra.mxu0 0.0
    %143 = vmatpush.msra.mxu0 %v74
    %144 = vmatpush.msra.mxu0 %v70
    %145 = vmatpush.msra.mxu0 %v66
    %146 = vmatpush.msra.mxu0 %v62
    %147 = vmatpush.msra.mxu0 %v58
    %148 = vmatpush.msra.mxu0 %v54
    %149 = vmatpush.msra.mxu0 %v50
    %150 = vmatpush.msra.mxu0 %v46
    %151 = vmatmul.f32.gmra.mxu0 %v89
    %v152 = vpop.f32.mrf.mxu0
    %v153 = vadd.f32 %v80, %v152
    %154 = vmatmul.f32.gmra.mxu0 %v92
    %v155 = vpop.f32.mrf.mxu0
    %v156 = vadd.f32 %v80, %v155
    %157 = vmatmul.f32.gmra.mxu0 %v95
    %v158 = vpop.f32.mrf.mxu0
    %v159 = vadd.f32 %v80, %v158
    %160 = vmatmul.f32.gmra.mxu0 %v98
    %v161 = vpop.f32.mrf.mxu0
    %v162 = vadd.f32 %v80, %v161
    %163 = vmatmul.f32.gmra.mxu0 %v101
    %v164 = vpop.f32.mrf.mxu0
    %v165 = vadd.f32 %v80, %v164
    %166 = vdwg.mxu0
    %167 = vmatpush.msra.mxu0 0.0
    %168 = vmatpush.msra.mxu0 0.0
    %169 = vmatpush.msra.mxu0 0.0
    %170 = vmatpush.msra.mxu0 0.0
    %171 = vmatpush.msra.mxu0 0.0
    %172 = vmatpush.msra.mxu0 0.0
    %173 = vmatpush.msra.mxu0 0.0
    %174 = vmatpush.msra.mxu0 0.0
    %175 = vmatpush.msra.mxu0 %v75
    %176 = vmatpush.msra.mxu0 %v71
    %177 = vmatpush.msra.mxu0 %v67
    %178 = vmatpush.msra.mxu0 %v63
    %179 = vmatpush.msra.mxu0 %v59
    %180 = vmatpush.msra.mxu0 %v55
    %181 = vmatpush.msra.mxu0 %v51
    %182 = vmatpush.msra.mxu0 %v47
    %183 = vmatmul.f32.gmra.mxu0 %v89
    %v184 = vpop.f32.mrf.mxu0
    %v185 = vadd.f32 %v81, %v184
    %186 = vmatmul.f32.gmra.mxu0 %v92
    %v187 = vpop.f32.mrf.mxu0
    %v188 = vadd.f32 %v81, %v187
    %189 = vmatmul.f32.gmra.mxu0 %v95
    %v190 = vpop.f32.mrf.mxu0
    %v191 = vadd.f32 %v81, %v190
    %192 = vmatmul.f32.gmra.mxu0 %v98
    %v193 = vpop.f32.mrf.mxu0
    %v194 = vadd.f32 %v81, %v193
    %195 = vmatmul.f32.gmra.mxu0 %v101
    %v196 = vpop.f32.mrf.mxu0
    %v197 = vadd.f32 %v81, %v196
    %198 = vdwg.mxu0
    %199 = vmatpush.msra.mxu0 0.0
    %200 = vmatpush.msra.mxu0 0.0
    %201 = vmatpush.msra.mxu0 0.0
    %202 = vmatpush.msra.mxu0 0.0
    %203 = vmatpush.msra.mxu0 0.0
    %204 = vmatpush.msra.mxu0 0.0
    %205 = vmatpush.msra.mxu0 0.0
    %206 = vmatpush.msra.mxu0 0.0
    %207 = vmatpush.msra.mxu0 %v76
    %208 = vmatpush.msra.mxu0 %v72
    %209 = vmatpush.msra.mxu0 %v68
    %210 = vmatpush.msra.mxu0 %v64
    %211 = vmatpush.msra.mxu0 %v60
    %212 = vmatpush.msra.mxu0 %v56
    %213 = vmatpush.msra.mxu0 %v52
    %214 = vmatpush.msra.mxu0 %v48
    %215 = vmatmul.f32.gmra.mxu0 %v89
    %v216 = vpop.f32.mrf.mxu0
    %v217 = vadd.f32 %v82, %v216
    %218 = vmatmul.f32.gmra.mxu0 %v92
    %v219 = vpop.f32.mrf.mxu0
    %v220 = vadd.f32 %v82, %v219
    %221 = vmatmul.f32.gmra.mxu0 %v95
    %v222 = vpop.f32.mrf.mxu0
    %v223 = vadd.f32 %v82, %v222
    %224 = vmatmul.f32.gmra.mxu0 %v98
    %v225 = vpop.f32.mrf.mxu0
    %v226 = vadd.f32 %v82, %v225
    %227 = vmatmul.f32.gmra.mxu0 %v101
    %v228 = vpop.f32.mrf.mxu0
    %v229 = vadd.f32 %v82, %v228
    %230 = vdwg.mxu0
    %231 = vst [vmem:[#allocation2] sm:$0xff] %v121
    %232 = vst [vmem:[#allocation2 + $0x8] sm:$0xff] %v153
    %233 = vst [vmem:[#allocation2 + $0x10] sm:$0xff] %v185
    %234 = vst [vmem:[#allocation2 + $0x18] sm:$0xff] %v217
    %235 = vst [vmem:[#allocation2 + $0x20] sm:$0xff] %v124
    %236 = vst [vmem:[#allocation2 + $0x28] sm:$0xff] %v156
    %237 = vst [vmem:[#allocation2 + $0x30] sm:$0xff] %v188
    %238 = vst [vmem:[#allocation2 + $0x38] sm:$0xff] %v220
    %239 = vst [vmem:[#allocation2 + $0x40] sm:$0xff] %v127
    %240 = vst [vmem:[#allocation2 + $0x48] sm:$0xff] %v159
    %241 = vst [vmem:[#allocation2 + $0x50] sm:$0xff] %v191
    %242 = vst [vmem:[#allocation2 + $0x58] sm:$0xff] %v223
    %243 = vst [vmem:[#allocation2 + $0x60] sm:$0xff] %v130
    %244 = vst [vmem:[#allocation2 + $0x68] sm:$0xff] %v162
    %245 = vst [vmem:[#allocation2 + $0x70] sm:$0xff] %v194
    %246 = vst [vmem:[#allocation2 + $0x78] sm:$0xff] %v226
    %247 = vst [vmem:[#allocation2 + $0x80] sm:$0xff] %v133
    %248 = vst [vmem:[#allocation2 + $0x88] sm:$0xff] %v165
    %249 = vst [vmem:[#allocation2 + $0x90] sm:$0xff] %v197
    %250 = vst [vmem:[#allocation2 + $0x98] sm:$0xff] %v229
    %v251 = vld [vmem:[#allocation2] sm:$0xff]
    %v252 = vld [vmem:[#allocation2 + $0x8] sm:$0xff]
    %v253 = vld [vmem:[#allocation2 + $0x10] sm:$0xff]
    %v254 = vld [vmem:[#allocation2 + $0x18] sm:$0xff]
    %v255 = vld [vmem:[#allocation3] sm:$0xff]
    %v256 = vld [vmem:[#allocation3 + $0x8] sm:$0xff]
    %v257 = vld [vmem:[#allocation3 + $0x10] sm:$0xff]
    %v258 = vld [vmem:[#allocation3 + $0x18] sm:$0xff]
    %v259 = vld [vmem:[#allocation3 + $0x20] sm:$0xff]
    %v260 = vld [vmem:[#allocation3 + $0x28] sm:$0xff]
    %v261 = vld [vmem:[#allocation3 + $0x30] sm:$0xff]
    %v262 = vld [vmem:[#allocation3 + $0x38] sm:$0xff]
    %v263 = vld [vmem:[#allocation3 + $0x40] sm:$0xff]
    %v264 = vld [vmem:[#allocation3 + $0x48] sm:$0xff]
    %v265 = vld [vmem:[#allocation3 + $0x50] sm:$0xff]
    %v266 = vld [vmem:[#allocation3 + $0x58] sm:$0xff]
    %v267 = vld [vmem:[#allocation3 + $0x60] sm:$0xff]
    %v268 = vld [vmem:[#allocation3 + $0x68] sm:$0xff]
    %v269 = vld [vmem:[#allocation3 + $0x70] sm:$0xff]
    %v270 = vld [vmem:[#allocation3 + $0x78] sm:$0xff]
    %v271 = vld [vmem:[#allocation3 + $0x80] sm:$0xff]
    %v272 = vld [vmem:[#allocation3 + $0x88] sm:$0xff]
    %v273 = vld [vmem:[#allocation3 + $0x90] sm:$0xff]
    %v274 = vld [vmem:[#allocation3 + $0x98] sm:$0xff]
    %v275 = vld [vmem:[#allocation3 + $0xa0] sm:$0xff]
    %v276 = vld [vmem:[#allocation3 + $0xa8] sm:$0xff]
    %v277 = vld [vmem:[#allocation3 + $0xb0] sm:$0xff]
    %v278 = vld [vmem:[#allocation3 + $0xb8] sm:$0xff]
    %v279 = vld [vmem:[#allocation3 + $0xc0] sm:$0xff]
    %v280 = vld [vmem:[#allocation3 + $0xc8] sm:$0xff]
    %v281 = vld [vmem:[#allocation3 + $0xd0] sm:$0xff]
    %v282 = vld [vmem:[#allocation3 + $0xd8] sm:$0xff]
    %v283 = vld [vmem:[#allocation3 + $0xe0] sm:$0xff]
    %v284 = vld [vmem:[#allocation3 + $0xe8] sm:$0xff]
    %v285 = vld [vmem:[#allocation3 + $0xf0] sm:$0xff]
    %v286 = vld [vmem:[#allocation3 + $0xf8] sm:$0xff]
    %v319 = vunpack.c.l.b16 %v255
    %v320 = vunpack.c.h.b16 %v255
    %v321 = vunpack.c.l.b16 %v256
    %v322 = vunpack.c.h.b16 %v256
    %v323 = vunpack.c.l.b16 %v257
    %v324 = vunpack.c.h.b16 %v257
    %v325 = vunpack.c.l.b16 %v258
    %v326 = vunpack.c.h.b16 %v258
    %v327 = vunpack.c.l.b16 %v259
    %v328 = vunpack.c.h.b16 %v259
    %v329 = vunpack.c.l.b16 %v260
    %v330 = vunpack.c.h.b16 %v260
    %v331 = vunpack.c.l.b16 %v261
    %v332 = vunpack.c.h.b16 %v261
    %v333 = vunpack.c.l.b16 %v262
    %v334 = vunpack.c.h.b16 %v262
    %v335 = vunpack.c.l.b16 %v263
    %v336 = vunpack.c.h.b16 %v263
    %v337 = vunpack.c.l.b16 %v264
    %v338 = vunpack.c.h.b16 %v264
    %v339 = vunpack.c.l.b16 %v265
    %v340 = vunpack.c.h.b16 %v265
    %v341 = vunpack.c.l.b16 %v266
    %v342 = vunpack.c.h.b16 %v266
    %v343 = vunpack.c.l.b16 %v267
    %v344 = vunpack.c.h.b16 %v267
    %v345 = vunpack.c.l.b16 %v268
    %v346 = vunpack.c.h.b16 %v268
    %v347 = vunpack.c.l.b16 %v269
    %v348 = vunpack.c.h.b16 %v269
    %v349 = vunpack.c.l.b16 %v270
    %v350 = vunpack.c.h.b16 %v270
    %v351 = vunpack.c.l.b16 %v271
    %v352 = vunpack.c.h.b16 %v271
    %v353 = vunpack.c.l.b16 %v272
    %v354 = vunpack.c.h.b16 %v272
    %v355 = vunpack.c.l.b16 %v273
    %v356 = vunpack.c.h.b16 %v273
    %v357 = vunpack.c.l.b16 %v274
    %v358 = vunpack.c.h.b16 %v274
    %v359 = vunpack.c.l.b16 %v275
    %v360 = vunpack.c.h.b16 %v275
    %v361 = vunpack.c.l.b16 %v276
    %v362 = vunpack.c.h.b16 %v276
    %v363 = vunpack.c.l.b16 %v277
    %v364 = vunpack.c.h.b16 %v277
    %v365 = vunpack.c.l.b16 %v278
    %v366 = vunpack.c.h.b16 %v278
    %v367 = vunpack.c.l.b16 %v279
    %v368 = vunpack.c.h.b16 %v279
    %v369 = vunpack.c.l.b16 %v280
    %v370 = vunpack.c.h.b16 %v280
    %v371 = vunpack.c.l.b16 %v281
    %v372 = vunpack.c.h.b16 %v281
    %v373 = vunpack.c.l.b16 %v282
    %v374 = vunpack.c.h.b16 %v282
    %v375 = vunpack.c.l.b16 %v283
    %v376 = vunpack.c.h.b16 %v283
    %v377 = vunpack.c.l.b16 %v284
    %v378 = vunpack.c.h.b16 %v284
    %v379 = vunpack.c.l.b16 %v285
    %v380 = vunpack.c.h.b16 %v285
    %v381 = vunpack.c.l.b16 %v286
    %v382 = vunpack.c.h.b16 %v286
    %v383 = vpack.c.b16 %v323, %v319
    %v384 = vpack.c.b16 %v324, %v320
    %v385 = vpack.c.b16 %v325, %v321
    %v386 = vpack.c.b16 %v326, %v322
    %v387 = vpack.c.b16 %v331, %v327
    %v388 = vpack.c.b16 %v332, %v328
    %v389 = vpack.c.b16 %v333, %v329
    %v390 = vpack.c.b16 %v334, %v330
    %v391 = vpack.c.b16 %v339, %v335
    %v392 = vpack.c.b16 %v340, %v336
    %v393 = vpack.c.b16 %v341, %v337
    %v394 = vpack.c.b16 %v342, %v338
    %v395 = vpack.c.b16 %v347, %v343
    %v396 = vpack.c.b16 %v348, %v344
    %v397 = vpack.c.b16 %v349, %v345
    %v398 = vpack.c.b16 %v350, %v346
    %v399 = vpack.c.b16 %v355, %v351
    %v400 = vpack.c.b16 %v356, %v352
    %v401 = vpack.c.b16 %v357, %v353
    %v402 = vpack.c.b16 %v358, %v354
    %v403 = vpack.c.b16 %v363, %v359
    %v404 = vpack.c.b16 %v364, %v360
    %v405 = vpack.c.b16 %v365, %v361
    %v406 = vpack.c.b16 %v366, %v362
    %v407 = vpack.c.b16 %v371, %v367
    %v408 = vpack.c.b16 %v372, %v368
    %v409 = vpack.c.b16 %v373, %v369
    %v410 = vpack.c.b16 %v374, %v370
    %v411 = vpack.c.b16 %v379, %v375
    %v412 = vpack.c.b16 %v380, %v376
    %v413 = vpack.c.b16 %v381, %v377
    %v414 = vpack.c.b16 %v382, %v378
    %447 = vmatpush.bf16.msra.mxu0 %v411
    %448 = vmatpush.bf16.msra.mxu0 %v407
    %449 = vmatpush.bf16.msra.mxu0 %v403
    %450 = vmatpush.bf16.msra.mxu0 %v399
    %451 = vmatpush.bf16.msra.mxu0 %v395
    %452 = vmatpush.bf16.msra.mxu0 %v391
    %453 = vmatpush.bf16.msra.mxu0 %v387
    %454 = vmatpush.bf16.msra.mxu0 %v383
    %455 = vmatmul.bf16.gmra.mxu0 0
    %v456 = vpop.f32.mrf.mxu0
    %v457 = vadd.f32 0.0, %v456
    %v458 = vpop.f32.mrf.mxu0
    %459 = vdwg.mxu0
    %460 = vmatpush.bf16.msra.mxu0 %v412
    %461 = vmatpush.bf16.msra.mxu0 %v408
    %462 = vmatpush.bf16.msra.mxu0 %v404
    %463 = vmatpush.bf16.msra.mxu0 %v400
    %464 = vmatpush.bf16.msra.mxu0 %v396
    %465 = vmatpush.bf16.msra.mxu0 %v392
    %466 = vmatpush.bf16.msra.mxu0 %v388
    %467 = vmatpush.bf16.msra.mxu0 %v384
    %468 = vmatmul.bf16.gmra.mxu0 0
    %v469 = vpop.f32.mrf.mxu0
    %v470 = vadd.f32 0.0, %v469
    %v471 = vpop.f32.mrf.mxu0
    %472 = vdwg.mxu0
    %473 = vmatpush.bf16.msra.mxu0 %v413
    %474 = vmatpush.bf16.msra.mxu0 %v409
    %475 = vmatpush.bf16.msra.mxu0 %v405
    %476 = vmatpush.bf16.msra.mxu0 %v401
    %477 = vmatpush.bf16.msra.mxu0 %v397
    %478 = vmatpush.bf16.msra.mxu0 %v393
    %479 = vmatpush.bf16.msra.mxu0 %v389
    %480 = vmatpush.bf16.msra.mxu0 %v385
    %481 = vmatmul.bf16.gmra.mxu0 0
    %v482 = vpop.f32.mrf.mxu0
    %v483 = vadd.f32 0.0, %v482
    %v484 = vpop.f32.mrf.mxu0
    %485 = vdwg.mxu0
    %486 = vmatpush.bf16.msra.mxu0 %v414
    %487 = vmatpush.bf16.msra.mxu0 %v410
    %488 = vmatpush.bf16.msra.mxu0 %v406
    %489 = vmatpush.bf16.msra.mxu0 %v402
    %490 = vmatpush.bf16.msra.mxu0 %v398
    %491 = vmatpush.bf16.msra.mxu0 %v394
    %492 = vmatpush.bf16.msra.mxu0 %v390
    %493 = vmatpush.bf16.msra.mxu0 %v386
    %494 = vmatmul.bf16.gmra.mxu0 0
    %v495 = vpop.f32.mrf.mxu0
    %v496 = vadd.f32 0.0, %v495
    %v497 = vpop.f32.mrf.mxu0
    %498 = vdwg.mxu0
    %v499 = vadd.f32 %v251, %v457
    %v500 = vadd.f32 %v252, %v470
    %v501 = vadd.f32 %v253, %v483
    %v502 = vadd.f32 %v254, %v496
    %v503 = vxor.u32 %v499, 2147483648
    %v504 = vmul.f32 %v503, 1.442695
    %v505 = vpow.pop %v504
    %v506 = vadd.f32 %v505, 1.0
    %v507 = vrcp.pop %v506
    %v508 = vmul.f32 %v506, %v507
    %v509 = vsub.f32 1.0, %v508
    %v510 = vmul.f32 %v507, %v509
    %v511 = vadd.f32 %v507, %v510
    %vm512 = vweird.f32 %v506
    %vm513 = vweird.f32 %v507
    %vm514 = vmor %vm512, %vm513
    %v515 = vsel %vm514, %v507, %v511
    %v516 = vand.u32 2147483647, %v506
    %vm517 = vcmp.eq.f32.partialorder %v516, 8.507059e+37
    %v518 = vand.u32 %v506, 2147483648
    %v519 = vor.u32 1.1754944e-38, %v518
    %v520 = vsel %vm517, %v519, %v515
    %v521 = vmul.f32 1.0, %v520
    %v522 = vxor.u32 %v500, 2147483648
    %v523 = vmul.f32 %v522, 1.442695
    %v524 = vpow.pop %v523
    %v525 = vadd.f32 %v524, 1.0
    %v526 = vrcp.pop %v525
    %v527 = vmul.f32 %v525, %v526
    %v528 = vsub.f32 1.0, %v527
    %v529 = vmul.f32 %v526, %v528
    %v530 = vadd.f32 %v526, %v529
    %vm531 = vweird.f32 %v525
    %vm532 = vweird.f32 %v526
    %vm533 = vmor %vm531, %vm532
    %v534 = vsel %vm533, %v526, %v530
    %v535 = vand.u32 2147483647, %v525
    %vm536 = vcmp.eq.f32.partialorder %v535, 8.507059e+37
    %v537 = vand.u32 %v525, 2147483648
    %v538 = vor.u32 1.1754944e-38, %v537
    %v539 = vsel %vm536, %v538, %v534
    %v540 = vmul.f32 1.0, %v539
    %v541 = vtanh.pop %v501
    %v542 = vxor.u32 %v502, 2147483648
    %v543 = vmul.f32 %v542, 1.442695
    %v544 = vpow.pop %v543
    %v545 = vadd.f32 %v544, 1.0
    %v546 = vrcp.pop %v545
    %v547 = vmul.f32 %v545, %v546
    %v548 = vsub.f32 1.0, %v547
    %v549 = vmul.f32 %v546, %v548
    %v550 = vadd.f32 %v546, %v549
    %vm551 = vweird.f32 %v545
    %vm552 = vweird.f32 %v546
    %vm553 = vmor %vm551, %vm552
    %v554 = vsel %vm553, %v546, %v550
    %v555 = vand.u32 2147483647, %v545
    %vm556 = vcmp.eq.f32.partialorder %v555, 8.507059e+37
    %v557 = vand.u32 %v545, 2147483648
    %v558 = vor.u32 1.1754944e-38, %v557
    %v559 = vsel %vm556, %v558, %v554
    %v560 = vmul.f32 1.0, %v559
    %v561 = vmul.f32 %v540, 0.0
    %v562 = vmul.f32 %v521, %v541
    %v563 = vadd.f32 %v561, %v562
    %v564 = vtanh.pop %v563
    %v565 = vmul.f32 %v560, %v564
    %v566 = vld [vmem:[#allocation2 + $0x20] sm:$0xff]
    %v567 = vld [vmem:[#allocation2 + $0x28] sm:$0xff]
    %v568 = vld [vmem:[#allocation2 + $0x30] sm:$0xff]
    %v569 = vld [vmem:[#allocation2 + $0x38] sm:$0xff]
    %v570 = vpack.c.bf16 %v565, %v565
    %571 = vmatpush.bf16.msra.mxu0 %v411
    %572 = vmatpush.bf16.msra.mxu0 %v407
    %573 = vmatpush.bf16.msra.mxu0 %v403
    %574 = vmatpush.bf16.msra.mxu0 %v399
    %575 = vmatpush.bf16.msra.mxu0 %v395
    %576 = vmatpush.bf16.msra.mxu0 %v391
    %577 = vmatpush.bf16.msra.mxu0 %v387
    %578 = vmatpush.bf16.msra.mxu0 %v383
    %579 = vmatmul.bf16.gmra.mxu0 %v570
    %v580 = vpop.f32.mrf.mxu0
    %v581 = vadd.f32 0.0, %v580
    %v582 = vpop.f32.mrf.mxu0
    %583 = vdwg.mxu0
    %584 = vmatpush.bf16.msra.mxu0 %v412
    %585 = vmatpush.bf16.msra.mxu0 %v408
    %586 = vmatpush.bf16.msra.mxu0 %v404
    %587 = vmatpush.bf16.msra.mxu0 %v400
    %588 = vmatpush.bf16.msra.mxu0 %v396
    %589 = vmatpush.bf16.msra.mxu0 %v392
    %590 = vmatpush.bf16.msra.mxu0 %v388
    %591 = vmatpush.bf16.msra.mxu0 %v384
    %592 = vmatmul.bf16.gmra.mxu0 %v570
    %v593 = vpop.f32.mrf.mxu0
    %v594 = vadd.f32 0.0, %v593
    %v595 = vpop.f32.mrf.mxu0
    %596 = vdwg.mxu0
    %597 = vmatpush.bf16.msra.mxu0 %v413
    %598 = vmatpush.bf16.msra.mxu0 %v409
    %599 = vmatpush.bf16.msra.mxu0 %v405
    %600 = vmatpush.bf16.msra.mxu0 %v401
    %601 = vmatpush.bf16.msra.mxu0 %v397
    %602 = vmatpush.bf16.msra.mxu0 %v393
    %603 = vmatpush.bf16.msra.mxu0 %v389
    %604 = vmatpush.bf16.msra.mxu0 %v385
    %605 = vmatmul.bf16.gmra.mxu0 %v570
    %v606 = vpop.f32.mrf.mxu0
    %v607 = vadd.f32 0.0, %v606
    %v608 = vpop.f32.mrf.mxu0
    %609 = vdwg.mxu0
    %610 = vmatpush.bf16.msra.mxu0 %v414
    %611 = vmatpush.bf16.msra.mxu0 %v410
    %612 = vmatpush.bf16.msra.mxu0 %v406
    %613 = vmatpush.bf16.msra.mxu0 %v402
    %614 = vmatpush.bf16.msra.mxu0 %v398
    %615 = vmatpush.bf16.msra.mxu0 %v394
    %616 = vmatpush.bf16.msra.mxu0 %v390
    %617 = vmatpush.bf16.msra.mxu0 %v386
    %618 = vmatmul.bf16.gmra.mxu0 %v570
    %v619 = vpop.f32.mrf.mxu0
    %v620 = vadd.f32 0.0, %v619
    %v621 = vpop.f32.mrf.mxu0
    %622 = vdwg.mxu0
    %v623 = vadd.f32 %v566, %v581
    %v624 = vadd.f32 %v567, %v594
    %v625 = vadd.f32 %v568, %v607
    %v626 = vadd.f32 %v569, %v620
    %v627 = vxor.u32 %v623, 2147483648
    %v628 = vmul.f32 %v627, 1.442695
    %v629 = vpow.pop %v628
    %v630 = vadd.f32 %v629, 1.0
    %v631 = vrcp.pop %v630
    %v632 = vmul.f32 %v630, %v631
    %v633 = vsub.f32 1.0, %v632
    %v634 = vmul.f32 %v631, %v633
    %v635 = vadd.f32 %v631, %v634
    %vm636 = vweird.f32 %v630
    %vm637 = vweird.f32 %v631
    %vm638 = vmor %vm636, %vm637
    %v639 = vsel %vm638, %v631, %v635
    %v640 = vand.u32 2147483647, %v630
    %vm641 = vcmp.eq.f32.partialorder %v640, 8.507059e+37
    %v642 = vand.u32 %v630, 2147483648
    %v643 = vor.u32 1.1754944e-38, %v642
    %v644 = vsel %vm641, %v643, %v639
    %v645 = vmul.f32 1.0, %v644
    %v646 = vxor.u32 %v624, 2147483648
    %v647 = vmul.f32 %v646, 1.442695
    %v648 = vpow.pop %v647
    %v649 = vadd.f32 %v648, 1.0
    %v650 = vrcp.pop %v649
    %v651 = vmul.f32 %v649, %v650
    %v652 = vsub.f32 1.0, %v651
    %v653 = vmul.f32 %v650, %v652
    %v654 = vadd.f32 %v650, %v653
    %vm655 = vweird.f32 %v649
    %vm656 = vweird.f32 %v650
    %vm657 = vmor %vm655, %vm656
    %v658 = vsel %vm657, %v650, %v654
    %v659 = vand.u32 2147483647, %v649
    %vm660 = vcmp.eq.f32.partialorder %v659, 8.507059e+37
    %v661 = vand.u32 %v649, 2147483648
    %v662 = vor.u32 1.1754944e-38, %v661
    %v663 = vsel %vm660, %v662, %v658
    %v664 = vmul.f32 1.0, %v663
    %v665 = vtanh.pop %v625
    %v666 = vxor.u32 %v626, 2147483648
    %v667 = vmul.f32 %v666, 1.442695
    %v668 = vpow.pop %v667
    %v669 = vadd.f32 %v668, 1.0
    %v670 = vrcp.pop %v669
    %v671 = vmul.f32 %v669, %v670
    %v672 = vsub.f32 1.0, %v671
    %v673 = vmul.f32 %v670, %v672
    %v674 = vadd.f32 %v670, %v673
    %vm675 = vweird.f32 %v669
    %vm676 = vweird.f32 %v670
    %vm677 = vmor %vm675, %vm676
    %v678 = vsel %vm677, %v670, %v674
    %v679 = vand.u32 2147483647, %v669
    %vm680 = vcmp.eq.f32.partialorder %v679, 8.507059e+37
    %v681 = vand.u32 %v669, 2147483648
    %v682 = vor.u32 1.1754944e-38, %v681
    %v683 = vsel %vm680, %v682, %v678
    %v684 = vmul.f32 1.0, %v683
    %v685 = vmul.f32 %v664, %v563
    %v686 = vmul.f32 %v645, %v665
    %v687 = vadd.f32 %v685, %v686
    %v688 = vtanh.pop %v687
    %v689 = vmul.f32 %v684, %v688
    %v690 = vld [vmem:[#allocation2 + $0x40] sm:$0xff]
    %v691 = vld [vmem:[#allocation2 + $0x48] sm:$0xff]
    %v692 = vld [vmem:[#allocation2 + $0x50] sm:$0xff]
    %v693 = vld [vmem:[#allocation2 + $0x58] sm:$0xff]
    %v694 = vpack.c.bf16 %v689, %v689
    %695 = vmatpush.bf16.msra.mxu0 %v411
    %696 = vmatpush.bf16.msra.mxu0 %v407
    %697 = vmatpush.bf16.msra.mxu0 %v403
    %698 = vmatpush.bf16.msra.mxu0 %v399
    %699 = vmatpush.bf16.msra.mxu0 %v395
    %700 = vmatpush.bf16.msra.mxu0 %v391
    %701 = vmatpush.bf16.msra.mxu0 %v387
    %702 = vmatpush.bf16.msra.mxu0 %v383
    %703 = vmatmul.bf16.gmra.mxu0 %v694
    %v704 = vpop.f32.mrf.mxu0
    %v705 = vadd.f32 0.0, %v704
    %v706 = vpop.f32.mrf.mxu0
    %707 = vdwg.mxu0
    %708 = vmatpush.bf16.msra.mxu0 %v412
    %709 = vmatpush.bf16.msra.mxu0 %v408
    %710 = vmatpush.bf16.msra.mxu0 %v404
    %711 = vmatpush.bf16.msra.mxu0 %v400
    %712 = vmatpush.bf16.msra.mxu0 %v396
    %713 = vmatpush.bf16.msra.mxu0 %v392
    %714 = vmatpush.bf16.msra.mxu0 %v388
    %715 = vmatpush.bf16.msra.mxu0 %v384
    %716 = vmatmul.bf16.gmra.mxu0 %v694
    %v717 = vpop.f32.mrf.mxu0
    %v718 = vadd.f32 0.0, %v717
    %v719 = vpop.f32.mrf.mxu0
    %720 = vdwg.mxu0
    %721 = vmatpush.bf16.msra.mxu0 %v413
    %722 = vmatpush.bf16.msra.mxu0 %v409
    %723 = vmatpush.bf16.msra.mxu0 %v405
    %724 = vmatpush.bf16.msra.mxu0 %v401
    %725 = vmatpush.bf16.msra.mxu0 %v397
    %726 = vmatpush.bf16.msra.mxu0 %v393
    %727 = vmatpush.bf16.msra.mxu0 %v389
    %728 = vmatpush.bf16.msra.mxu0 %v385
    %729 = vmatmul.bf16.gmra.mxu0 %v694
    %v730 = vpop.f32.mrf.mxu0
    %v731 = vadd.f32 0.0, %v730
    %v732 = vpop.f32.mrf.mxu0
    %733 = vdwg.mxu0
    %734 = vmatpush.bf16.msra.mxu0 %v414
    %735 = vmatpush.bf16.msra.mxu0 %v410
    %736 = vmatpush.bf16.msra.mxu0 %v406
    %737 = vmatpush.bf16.msra.mxu0 %v402
    %738 = vmatpush.bf16.msra.mxu0 %v398
    %739 = vmatpush.bf16.msra.mxu0 %v394
    %740 = vmatpush.bf16.msra.mxu0 %v390
    %741 = vmatpush.bf16.msra.mxu0 %v386
    %742 = vmatmul.bf16.gmra.mxu0 %v694
    %v743 = vpop.f32.mrf.mxu0
    %v744 = vadd.f32 0.0, %v743
    %v745 = vpop.f32.mrf.mxu0
    %746 = vdwg.mxu0
    %v747 = vadd.f32 %v690, %v705
    %v748 = vadd.f32 %v691, %v718
    %v749 = vadd.f32 %v692, %v731
    %v750 = vadd.f32 %v693, %v744
    %v751 = vxor.u32 %v747, 2147483648
    %v752 = vmul.f32 %v751, 1.442695
    %v753 = vpow.pop %v752
    %v754 = vadd.f32 %v753, 1.0
    %v755 = vrcp.pop %v754
    %v756 = vmul.f32 %v754, %v755
    %v757 = vsub.f32 1.0, %v756
    %v758 = vmul.f32 %v755, %v757
    %v759 = vadd.f32 %v755, %v758
    %vm760 = vweird.f32 %v754
    %vm761 = vweird.f32 %v755
    %vm762 = vmor %vm760, %vm761
    %v763 = vsel %vm762, %v755, %v759
    %v764 = vand.u32 2147483647, %v754
    %vm765 = vcmp.eq.f32.partialorder %v764, 8.507059e+37
    %v766 = vand.u32 %v754, 2147483648
    %v767 = vor.u32 1.1754944e-38, %v766
    %v768 = vsel %vm765, %v767, %v763
    %v769 = vmul.f32 1.0, %v768
    %v770 = vxor.u32 %v748, 2147483648
    %v771 = vmul.f32 %v770, 1.442695
    %v772 = vpow.pop %v771
    %v773 = vadd.f32 %v772, 1.0
    %v774 = vrcp.pop %v773
    %v775 = vmul.f32 %v773, %v774
    %v776 = vsub.f32 1.0, %v775
    %v777 = vmul.f32 %v774, %v776
    %v778 = vadd.f32 %v774, %v777
    %vm779 = vweird.f32 %v773
    %vm780 = vweird.f32 %v774
    %vm781 = vmor %vm779, %vm780
    %v782 = vsel %vm781, %v774, %v778
    %v783 = vand.u32 2147483647, %v773
    %vm784 = vcmp.eq.f32.partialorder %v783, 8.507059e+37
    %v785 = vand.u32 %v773, 2147483648
    %v786 = vor.u32 1.1754944e-38, %v785
    %v787 = vsel %vm784, %v786, %v782
    %v788 = vmul.f32 1.0, %v787
    %v789 = vtanh.pop %v749
    %v790 = vxor.u32 %v750, 2147483648
    %v791 = vmul.f32 %v790, 1.442695
    %v792 = vpow.pop %v791
    %v793 = vadd.f32 %v792, 1.0
    %v794 = vrcp.pop %v793
    %v795 = vmul.f32 %v793, %v794
    %v796 = vsub.f32 1.0, %v795
    %v797 = vmul.f32 %v794, %v796
    %v798 = vadd.f32 %v794, %v797
    %vm799 = vweird.f32 %v793
    %vm800 = vweird.f32 %v794
    %vm801 = vmor %vm799, %vm800
    %v802 = vsel %vm801, %v794, %v798
    %v803 = vand.u32 2147483647, %v793
    %vm804 = vcmp.eq.f32.partialorder %v803, 8.507059e+37
    %v805 = vand.u32 %v793, 2147483648
    %v806 = vor.u32 1.1754944e-38, %v805
    %v807 = vsel %vm804, %v806, %v802
    %v808 = vmul.f32 1.0, %v807
    %v809 = vmul.f32 %v788, %v687
    %v810 = vmul.f32 %v769, %v789
    %v811 = vadd.f32 %v809, %v810
    %v812 = vtanh.pop %v811
    %v813 = vmul.f32 %v808, %v812
    %v814 = vld [vmem:[#allocation2 + $0x60] sm:$0xff]
    %v815 = vld [vmem:[#allocation2 + $0x68] sm:$0xff]
    %v816 = vld [vmem:[#allocation2 + $0x70] sm:$0xff]
    %v817 = vld [vmem:[#allocation2 + $0x78] sm:$0xff]
    %v818 = vpack.c.bf16 %v813, %v813
    %819 = vmatpush.bf16.msra.mxu0 %v411
    %820 = vmatpush.bf16.msra.mxu0 %v407
    %821 = vmatpush.bf16.msra.mxu0 %v403
    %822 = vmatpush.bf16.msra.mxu0 %v399
    %823 = vmatpush.bf16.msra.mxu0 %v395
    %824 = vmatpush.bf16.msra.mxu0 %v391
    %825 = vmatpush.bf16.msra.mxu0 %v387
    %826 = vmatpush.bf16.msra.mxu0 %v383
    %827 = vmatmul.bf16.gmra.mxu0 %v818
    %v828 = vpop.f32.mrf.mxu0
    %v829 = vadd.f32 0.0, %v828
    %v830 = vpop.f32.mrf.mxu0
    %831 = vdwg.mxu0
    %832 = vmatpush.bf16.msra.mxu0 %v412
    %833 = vmatpush.bf16.msra.mxu0 %v408
    %834 = vmatpush.bf16.msra.mxu0 %v404
    %835 = vmatpush.bf16.msra.mxu0 %v400
    %836 = vmatpush.bf16.msra.mxu0 %v396
    %837 = vmatpush.bf16.msra.mxu0 %v392
    %838 = vmatpush.bf16.msra.mxu0 %v388
    %839 = vmatpush.bf16.msra.mxu0 %v384
    %840 = vmatmul.bf16.gmra.mxu0 %v818
    %v841 = vpop.f32.mrf.mxu0
    %v842 = vadd.f32 0.0, %v841
    %v843 = vpop.f32.mrf.mxu0
    %844 = vdwg.mxu0
    %845 = vmatpush.bf16.msra.mxu0 %v413
    %846 = vmatpush.bf16.msra.mxu0 %v409
    %847 = vmatpush.bf16.msra.mxu0 %v405
    %848 = vmatpush.bf16.msra.mxu0 %v401
    %849 = vmatpush.bf16.msra.mxu0 %v397
    %850 = vmatpush.bf16.msra.mxu0 %v393
    %851 = vmatpush.bf16.msra.mxu0 %v389
    %852 = vmatpush.bf16.msra.mxu0 %v385
    %853 = vmatmul.bf16.gmra.mxu0 %v818
    %v854 = vpop.f32.mrf.mxu0
    %v855 = vadd.f32 0.0, %v854
    %v856 = vpop.f32.mrf.mxu0
    %857 = vdwg.mxu0
    %858 = vmatpush.bf16.msra.mxu0 %v414
    %859 = vmatpush.bf16.msra.mxu0 %v410
    %860 = vmatpush.bf16.msra.mxu0 %v406
    %861 = vmatpush.bf16.msra.mxu0 %v402
    %862 = vmatpush.bf16.msra.mxu0 %v398
    %863 = vmatpush.bf16.msra.mxu0 %v394
    %864 = vmatpush.bf16.msra.mxu0 %v390
    %865 = vmatpush.bf16.msra.mxu0 %v386
    %866 = vmatmul.bf16.gmra.mxu0 %v818
    %v867 = vpop.f32.mrf.mxu0
    %v868 = vadd.f32 0.0, %v867
    %v869 = vpop.f32.mrf.mxu0
    %870 = vdwg.mxu0
    %v871 = vadd.f32 %v814, %v829
    %v872 = vadd.f32 %v815, %v842
    %v873 = vadd.f32 %v816, %v855
    %v874 = vadd.f32 %v817, %v868
    %v875 = vxor.u32 %v871, 2147483648
    %v876 = vmul.f32 %v875, 1.442695
    %v877 = vpow.pop %v876
    %v878 = vadd.f32 %v877, 1.0
    %v879 = vrcp.pop %v878
    %v880 = vmul.f32 %v878, %v879
    %v881 = vsub.f32 1.0, %v880
    %v882 = vmul.f32 %v879, %v881
    %v883 = vadd.f32 %v879, %v882
    %vm884 = vweird.f32 %v878
    %vm885 = vweird.f32 %v879
    %vm886 = vmor %vm884, %vm885
    %v887 = vsel %vm886, %v879, %v883
    %v888 = vand.u32 2147483647, %v878
    %vm889 = vcmp.eq.f32.partialorder %v888, 8.507059e+37
    %v890 = vand.u32 %v878, 2147483648
    %v891 = vor.u32 1.1754944e-38, %v890
    %v892 = vsel %vm889, %v891, %v887
    %v893 = vmul.f32 1.0, %v892
    %v894 = vxor.u32 %v872, 2147483648
    %v895 = vmul.f32 %v894, 1.442695
    %v896 = vpow.pop %v895
    %v897 = vadd.f32 %v896, 1.0
    %v898 = vrcp.pop %v897
    %v899 = vmul.f32 %v897, %v898
    %v900 = vsub.f32 1.0, %v899
    %v901 = vmul.f32 %v898, %v900
    %v902 = vadd.f32 %v898, %v901
    %vm903 = vweird.f32 %v897
    %vm904 = vweird.f32 %v898
    %vm905 = vmor %vm903, %vm904
    %v906 = vsel %vm905, %v898, %v902
    %v907 = vand.u32 2147483647, %v897
    %vm908 = vcmp.eq.f32.partialorder %v907, 8.507059e+37
    %v909 = vand.u32 %v897, 2147483648
    %v910 = vor.u32 1.1754944e-38, %v909
    %v911 = vsel %vm908, %v910, %v906
    %v912 = vmul.f32 1.0, %v911
    %v913 = vtanh.pop %v873
    %v914 = vxor.u32 %v874, 2147483648
    %v915 = vmul.f32 %v914, 1.442695
    %v916 = vpow.pop %v915
    %v917 = vadd.f32 %v916, 1.0
    %v918 = vrcp.pop %v917
    %v919 = vmul.f32 %v917, %v918
    %v920 = vsub.f32 1.0, %v919
    %v921 = vmul.f32 %v918, %v920
    %v922 = vadd.f32 %v918, %v921
    %vm923 = vweird.f32 %v917
    %vm924 = vweird.f32 %v918
    %vm925 = vmor %vm923, %vm924
    %v926 = vsel %vm925, %v918, %v922
    %v927 = vand.u32 2147483647, %v917
    %vm928 = vcmp.eq.f32.partialorder %v927, 8.507059e+37
    %v929 = vand.u32 %v917, 2147483648
    %v930 = vor.u32 1.1754944e-38, %v929
    %v931 = vsel %vm928, %v930, %v926
    %v932 = vmul.f32 1.0, %v931
    %v933 = vmul.f32 %v912, %v811
    %v934 = vmul.f32 %v893, %v913
    %v935 = vadd.f32 %v933, %v934
    %v936 = vtanh.pop %v935
    %v937 = vmul.f32 %v932, %v936
    %v938 = vld [vmem:[#allocation2 + $0x80] sm:$0xff]
    %v939 = vld [vmem:[#allocation2 + $0x88] sm:$0xff]
    %v940 = vld [vmem:[#allocation2 + $0x90] sm:$0xff]
    %v941 = vld [vmem:[#allocation2 + $0x98] sm:$0xff]
    %v942 = vpack.c.bf16 %v937, %v937
    %943 = vmatpush.bf16.msra.mxu0 %v411
    %944 = vmatpush.bf16.msra.mxu0 %v407
    %945 = vmatpush.bf16.msra.mxu0 %v403
    %946 = vmatpush.bf16.msra.mxu0 %v399
    %947 = vmatpush.bf16.msra.mxu0 %v395
    %948 = vmatpush.bf16.msra.mxu0 %v391
    %949 = vmatpush.bf16.msra.mxu0 %v387
    %950 = vmatpush.bf16.msra.mxu0 %v383
    %951 = vmatmul.bf16.gmra.mxu0 %v942
    %v952 = vpop.f32.mrf.mxu0
    %v953 = vadd.f32 0.0, %v952
    %v954 = vpop.f32.mrf.mxu0
    %955 = vdwg.mxu0
    %956 = vmatpush.bf16.msra.mxu0 %v412
    %957 = vmatpush.bf16.msra.mxu0 %v408
    %958 = vmatpush.bf16.msra.mxu0 %v404
    %959 = vmatpush.bf16.msra.mxu0 %v400
    %960 = vmatpush.bf16.msra.mxu0 %v396
    %961 = vmatpush.bf16.msra.mxu0 %v392
    %962 = vmatpush.bf16.msra.mxu0 %v388
    %963 = vmatpush.bf16.msra.mxu0 %v384
    %964 = vmatmul.bf16.gmra.mxu0 %v942
    %v965 = vpop.f32.mrf.mxu0
    %v966 = vadd.f32 0.0, %v965
    %v967 = vpop.f32.mrf.mxu0
    %968 = vdwg.mxu0
    %969 = vmatpush.bf16.msra.mxu0 %v413
    %970 = vmatpush.bf16.msra.mxu0 %v409
    %971 = vmatpush.bf16.msra.mxu0 %v405
    %972 = vmatpush.bf16.msra.mxu0 %v401
    %973 = vmatpush.bf16.msra.mxu0 %v397
    %974 = vmatpush.bf16.msra.mxu0 %v393
    %975 = vmatpush.bf16.msra.mxu0 %v389
    %976 = vmatpush.bf16.msra.mxu0 %v385
    %977 = vmatmul.bf16.gmra.mxu0 %v942
    %v978 = vpop.f32.mrf.mxu0
    %v979 = vadd.f32 0.0, %v978
    %v980 = vpop.f32.mrf.mxu0
    %981 = vdwg.mxu0
    %982 = vmatpush.bf16.msra.mxu0 %v414
    %983 = vmatpush.bf16.msra.mxu0 %v410
    %984 = vmatpush.bf16.msra.mxu0 %v406
    %985 = vmatpush.bf16.msra.mxu0 %v402
    %986 = vmatpush.bf16.msra.mxu0 %v398
    %987 = vmatpush.bf16.msra.mxu0 %v394
    %988 = vmatpush.bf16.msra.mxu0 %v390
    %989 = vmatpush.bf16.msra.mxu0 %v386
    %990 = vmatmul.bf16.gmra.mxu0 %v942
    %v991 = vpop.f32.mrf.mxu0
    %v992 = vadd.f32 0.0, %v991
    %v993 = vpop.f32.mrf.mxu0
    %994 = vdwg.mxu0
    %v995 = vadd.f32 %v938, %v953
    %v996 = vadd.f32 %v939, %v966
    %v997 = vadd.f32 %v940, %v979
    %v998 = vadd.f32 %v941, %v992
    %v999 = vxor.u32 %v995, 2147483648
    %v1000 = vmul.f32 %v999, 1.442695
    %v1001 = vpow.pop %v1000
    %v1002 = vadd.f32 %v1001, 1.0
    %v1003 = vrcp.pop %v1002
    %v1004 = vmul.f32 %v1002, %v1003
    %v1005 = vsub.f32 1.0, %v1004
    %v1006 = vmul.f32 %v1003, %v1005
    %v1007 = vadd.f32 %v1003, %v1006
    %vm1008 = vweird.f32 %v1002
    %vm1009 = vweird.f32 %v1003
    %vm1010 = vmor %vm1008, %vm1009
    %v1011 = vsel %vm1010, %v1003, %v1007
    %v1012 = vand.u32 2147483647, %v1002
    %vm1013 = vcmp.eq.f32.partialorder %v1012, 8.507059e+37
    %v1014 = vand.u32 %v1002, 2147483648
    %v1015 = vor.u32 1.1754944e-38, %v1014
    %v1016 = vsel %vm1013, %v1015, %v1011
    %v1017 = vmul.f32 1.0, %v1016
    %v1018 = vxor.u32 %v996, 2147483648
    %v1019 = vmul.f32 %v1018, 1.442695
    %v1020 = vpow.pop %v1019
    %v1021 = vadd.f32 %v1020, 1.0
    %v1022 = vrcp.pop %v1021
    %v1023 = vmul.f32 %v1021, %v1022
    %v1024 = vsub.f32 1.0, %v1023
    %v1025 = vmul.f32 %v1022, %v1024
    %v1026 = vadd.f32 %v1022, %v1025
    %vm1027 = vweird.f32 %v1021
    %vm1028 = vweird.f32 %v1022
    %vm1029 = vmor %vm1027, %vm1028
    %v1030 = vsel %vm1029, %v1022, %v1026
    %v1031 = vand.u32 2147483647, %v1021
    %vm1032 = vcmp.eq.f32.partialorder %v1031, 8.507059e+37
    %v1033 = vand.u32 %v1021, 2147483648
    %v1034 = vor.u32 1.1754944e-38, %v1033
    %v1035 = vsel %vm1032, %v1034, %v1030
    %v1036 = vmul.f32 1.0, %v1035
    %v1037 = vtanh.pop %v997
    %v1038 = vxor.u32 %v998, 2147483648
    %v1039 = vmul.f32 %v1038, 1.442695
    %v1040 = vpow.pop %v1039
    %v1041 = vadd.f32 %v1040, 1.0
    %v1042 = vrcp.pop %v1041
    %v1043 = vmul.f32 %v1041, %v1042
    %v1044 = vsub.f32 1.0, %v1043
    %v1045 = vmul.f32 %v1042, %v1044
    %v1046 = vadd.f32 %v1042, %v1045
    %vm1047 = vweird.f32 %v1041
    %vm1048 = vweird.f32 %v1042
    %vm1049 = vmor %vm1047, %vm1048
    %v1050 = vsel %vm1049, %v1042, %v1046
    %v1051 = vand.u32 2147483647, %v1041
    %vm1052 = vcmp.eq.f32.partialorder %v1051, 8.507059e+37
    %v1053 = vand.u32 %v1041, 2147483648
    %v1054 = vor.u32 1.1754944e-38, %v1053
    %v1055 = vsel %vm1052, %v1054, %v1050
    %v1056 = vmul.f32 1.0, %v1055
    %v1057 = vmul.f32 %v1036, %v935
    %v1058 = vmul.f32 %v1017, %v1037
    %v1059 = vadd.f32 %v1057, %v1058
    %v1060 = vtanh.pop %v1059
    %v1061 = vmul.f32 %v1056, %v1060
    %v1062 = vpack.c.bf16 %v1061, %v1061
    %v1063 = vld [vmem:[%s4] sm:$0xff]
    %v1064 = vld [vmem:[%s4 + $0x8] sm:$0xff]
    %v1065 = vld [vmem:[%s4 + $0x10] sm:$0xff]
    %v1066 = vld [vmem:[%s4 + $0x18] sm:$0xff]
    %v1067 = vld [vmem:[%s4 + $0x20] sm:$0xff]
    %v1068 = vld [vmem:[%s4 + $0x28] sm:$0xff]
    %v1069 = vld [vmem:[%s4 + $0x30] sm:$0xff]
    %v1070 = vld [vmem:[%s4 + $0x38] sm:$0xff]
    %v1071 = vld [vmem:[%s4 + $0x40] sm:$0xff]
    %v1072 = vld [vmem:[%s4 + $0x48] sm:$0xff]
    %v1073 = vld [vmem:[%s4 + $0x50] sm:$0xff]
    %v1074 = vld [vmem:[%s4 + $0x58] sm:$0xff]
    %v1075 = vld [vmem:[%s4 + $0x60] sm:$0xff]
    %v1076 = vld [vmem:[%s4 + $0x68] sm:$0xff]
    %v1077 = vld [vmem:[%s4 + $0x70] sm:$0xff]
    %v1078 = vld [vmem:[%s4 + $0x78] sm:$0xff]
    %v1079 = vld [vmem:[%s5] sm:$0x3]
    %v1081 = vperm.slane %v1079, 0
    %v1082 = vperm.slane %v1079, 1
    %v1101 = vunpack.c.l.b16 %v1063
    %v1102 = vunpack.c.h.b16 %v1063
    %v1103 = vunpack.c.l.b16 %v1064
    %v1104 = vunpack.c.h.b16 %v1064
    %v1105 = vunpack.c.l.b16 %v1065
    %v1106 = vunpack.c.h.b16 %v1065
    %v1107 = vunpack.c.l.b16 %v1066
    %v1108 = vunpack.c.h.b16 %v1066
    %v1109 = vunpack.c.l.b16 %v1067
    %v1110 = vunpack.c.h.b16 %v1067
    %v1111 = vunpack.c.l.b16 %v1068
    %v1112 = vunpack.c.h.b16 %v1068
    %v1113 = vunpack.c.l.b16 %v1069
    %v1114 = vunpack.c.h.b16 %v1069
    %v1115 = vunpack.c.l.b16 %v1070
    %v1116 = vunpack.c.h.b16 %v1070
    %v1117 = vunpack.c.l.b16 %v1071
    %v1118 = vunpack.c.h.b16 %v1071
    %v1119 = vunpack.c.l.b16 %v1072
    %v1120 = vunpack.c.h.b16 %v1072
    %v1121 = vunpack.c.l.b16 %v1073
    %v1122 = vunpack.c.h.b16 %v1073
    %v1123 = vunpack.c.l.b16 %v1074
    %v1124 = vunpack.c.h.b16 %v1074
    %v1125 = vunpack.c.l.b16 %v1075
    %v1126 = vunpack.c.h.b16 %v1075
    %v1127 = vunpack.c.l.b16 %v1076
    %v1128 = vunpack.c.h.b16 %v1076
    %v1129 = vunpack.c.l.b16 %v1077
    %v1130 = vunpack.c.h.b16 %v1077
    %v1131 = vunpack.c.l.b16 %v1078
    %v1132 = vunpack.c.h.b16 %v1078
    %v1133 = vpack.c.b16 %v1103, %v1101
    %v1134 = vpack.c.b16 %v1104, %v1102
    %v1135 = vpack.c.b16 %v1107, %v1105
    %v1136 = vpack.c.b16 %v1108, %v1106
    %v1137 = vpack.c.b16 %v1111, %v1109
    %v1138 = vpack.c.b16 %v1112, %v1110
    %v1139 = vpack.c.b16 %v1115, %v1113
    %v1140 = vpack.c.b16 %v1116, %v1114
    %v1141 = vpack.c.b16 %v1119, %v1117
    %v1142 = vpack.c.b16 %v1120, %v1118
    %v1143 = vpack.c.b16 %v1123, %v1121
    %v1144 = vpack.c.b16 %v1124, %v1122
    %v1145 = vpack.c.b16 %v1127, %v1125
    %v1146 = vpack.c.b16 %v1128, %v1126
    %v1147 = vpack.c.b16 %v1131, %v1129
    %v1148 = vpack.c.b16 %v1132, %v1130
    %1165 = vmatpush.bf16.msra.mxu0 %v1147
    %1166 = vmatpush.bf16.msra.mxu0 %v1145
    %1167 = vmatpush.bf16.msra.mxu0 %v1143
    %1168 = vmatpush.bf16.msra.mxu0 %v1141
    %1169 = vmatpush.bf16.msra.mxu0 %v1139
    %1170 = vmatpush.bf16.msra.mxu0 %v1137
    %1171 = vmatpush.bf16.msra.mxu0 %v1135
    %1172 = vmatpush.bf16.msra.mxu0 %v1133
    %1173 = vmatmul.bf16.gmra.mxu0 %v1062
    %v1174 = vpop.f32.mrf.mxu0
    %v1175 = vadd.f32 %v1081, %v1174
    %v1176 = vpop.f32.mrf.mxu0
    %1177 = vdwg.mxu0
    %1178 = vmatpush.bf16.msra.mxu0 %v1148
    %1179 = vmatpush.bf16.msra.mxu0 %v1146
    %1180 = vmatpush.bf16.msra.mxu0 %v1144
    %1181 = vmatpush.bf16.msra.mxu0 %v1142
    %1182 = vmatpush.bf16.msra.mxu0 %v1140
    %1183 = vmatpush.bf16.msra.mxu0 %v1138
    %1184 = vmatpush.bf16.msra.mxu0 %v1136
    %1185 = vmatpush.bf16.msra.mxu0 %v1134
    %1186 = vmatmul.bf16.gmra.mxu0 %v1062
    %v1187 = vpop.f32.mrf.mxu0
    %v1188 = vadd.f32 %v1082, %v1187
    %v1189 = vpop.f32.mrf.mxu0
    %1190 = vdwg.mxu0
    %1191 = vst [vmem:[%s6] sm:$0xff] %v1175
    %1192 = vst [vmem:[%s6 + $0x8] sm:$0xff] %v1188
    // Predicated region
    $region30: #{lstm_model_forward.1} parent=1 // pred_check
      _
    $region31: #{lstm_model_forward.1} parent=1 // pred_check_branch
      %1194 = sbr.rel (0) target = $region33
    $region32: #{lstm_model_forward.1} parent=1 // pred_region
      _
    $region33: #{lstm_model_forward.1} parent=1 // pred_fallthru
      _
    // Predicated region
    $region34: #{lstm_model_forward.1} parent=1 // pred_check
      _
    $region35: #{lstm_model_forward.1} parent=1 // pred_check_branch
      %1196 = sbr.rel (0) target = $region37
    $region36: #{lstm_model_forward.1} parent=1 // pred_region
      _
    $region37: #{lstm_model_forward.1} parent=1 // pred_fallthru
      _
    %1197 = vsyncpa [#allocation4], 1

</llo_original>
